<compile_context>
chip_gen: v7x
topology: tpu7x:2x2x1
jax: 0.10.0
libtpu: 0.0.40
codegen_flags: <defaults>
</compile_context>

<pallas_src>
import functools

import jax
import jax.numpy as jnp
from jax.experimental import pallas as pl
from jax.experimental.pallas import tpu as pltpu


_MAX_TS = 2048  # max spatial (lane-axis) tile width


def _vmem_budget_bytes() -> int:
    """Total per-grid-step VMEM budget (2x input buffers + 2x output block +
    f32 accumulator), chosen to stay inside each generation's *default*
    scoped VMEM limit (v5e 16 MiB, v6e/v7x 32 MiB)."""
    kind = ""
    try:
        kind = jax.devices()[0].device_kind.lower()
    except Exception:
        pass
    if "v6" in kind:
        return 24 << 20  # 32 MiB default scoped, 128 MiB physical
    if "v7" in kind or "7x" in kind:
        return 20 << 20  # 32 MiB default scoped, 64 MiB physical
    return 12 << 20      # v5e (16 MiB default scoped) and unknown: conservative


def _choose_spatial_tile(spatial: int) -> int:
    """Spatial (reduction) tile width.

    - Small extents: take the full extent (single reduction step, always a
      legal block even if not 128-aligned).
    - Large 128-aligned extents: prefer the largest exact lane-aligned
      divisor in [1024, 2048] (no masking needed).
    - Otherwise: cap at _MAX_TS; the ragged last reduction tile is masked
      in-kernel so padding garbage never enters the accumulator.
    """
    if spatial <= _MAX_TS:
        return spatial
    if spatial % 128 == 0:
        for ts in range(_MAX_TS, 1023, -128):
            if spatial % ts == 0:
                return ts
    return _MAX_TS


def _choose_row_tile(rows: int, ts: int, itemsize: int, budget_bytes: int) -> int:
    """Row tile, budgeted on *physical* (lane-padded, double-buffered) VMEM.

    A ragged last row tile is safe: garbage rows only pollute garbage output
    rows, and Pallas clips the out-of-bounds part of the output store.
    """
    sub = max(8, 32 // itemsize)           # sublane multiple: f32 8, bf16 16, int8 32
    ts_pad = ((ts + 127) // 128) * 128     # physical lane-padded tile width
    # Physical VMEM bytes per row of the block:
    #   2x double-buffered input + 2x lane-padded output block + f32 accumulator.
    per_row = 2 * ts_pad * itemsize + 2 * 128 * itemsize + 128 * 4
    max_tr = max(sub, (budget_bytes // per_row) // sub * sub)
    if rows > max_tr:
        return max_tr
    # Whole row extent fits in one block. Still expose >=2 blocks on the
    # parallel axis so both v7x TensorCores get work (neutral on v5e/v6e).
    if rows >= 2 * sub:
        half = ((rows + 1) // 2 + sub - 1) // sub * sub
        if half < rows:
            return half
    return rows


def _gap_kernel(x_ref, o_ref, acc_ref, *, inv_spatial: float, spatial: int, ts: int):
    k = pl.program_id(1)  # spatial (reduction) axis, innermost

    @pl.when(k == 0)
    def _init():
        acc_ref[...] = jnp.zeros_like(acc_ref)

    # Cast per spatial tile (no full-array f32 copy) and accumulate in f32.
    x = x_ref[...].astype(jnp.float32)
    if spatial % ts != 0:
        # Ragged last reduction tile: zero lanes past the true spatial extent
        # so padding garbage never enters the accumulator. Cheap VPU
        # cmp+select, hidden under the HBM DMA.
        valid = spatial - k * ts
        lane = jax.lax.broadcasted_iota(jnp.int32, x.shape, dimension=1)
        x = jnp.where(lane < valid, x, 0.0)
    acc_ref[...] += jnp.sum(x, axis=1, keepdims=True)

    @pl.when(k == pl.num_programs(1) - 1)
    def _finalize():
        # Exact 1/(H*W), applied once after all spatial tiles are summed.
        o_ref[...] = (acc_ref[...] * inv_spatial).astype(o_ref.dtype)


def global_avg_pool_2d(x):
    """x: (N, C, H, W) -> (N, C, 1, 1), mean over H*W (PyTorch GlobalAvgPool2d)."""
    n, c, h, w = x.shape
    rows, spatial = n * c, h * w
    x2d = x.reshape(rows, spatial)

    itemsize = jnp.dtype(x.dtype).itemsize
    ts = _choose_spatial_tile(spatial)
    tr = _choose_row_tile(rows, ts, itemsize, _vmem_budget_bytes())
    grid = (pl.cdiv(rows, tr), pl.cdiv(spatial, ts))

    kernel = functools.partial(
        _gap_kernel, inv_spatial=1.0 / float(spatial), spatial=spatial, ts=ts
    )

    out = pl.pallas_call(
        kernel,
        out_shape=jax.ShapeDtypeStruct((rows, 1), x.dtype),
        grid_spec=pltpu.PrefetchScalarGridSpec(
            num_scalar_prefetch=0,
            grid=grid,
            in_specs=[pl.BlockSpec((tr, ts), lambda i, k: (i, k))],
            # (rows, 1) column output kept as-is: <2% of HBM traffic, written
            # once per row tile; a lane-dense relayout would only add XLU work.
            out_specs=pl.BlockSpec((tr, 1), lambda i, k: (i, 0)),
            scratch_shapes=[pltpu.VMEM((tr, 1), jnp.float32)],
        ),
        compiler_params=pltpu.CompilerParams(
            # Row axis parallel (lets v7x's two TensorCores split the rows;
            # neutral on v5e/v6e); reduction axis last and arbitrary.
            dimension_semantics=("parallel", "arbitrary"),
        ),
        cost_estimate=pl.CostEstimate(
            flops=rows * spatial,
            transcendentals=0,
            bytes_accessed=rows * spatial * itemsize + rows * itemsize,
        ),
    )(x2d)

    return out.reshape(n, c, 1, 1)


def _check(x, atol, rtol):
    n, c = x.shape[0], x.shape[1]
    y = global_avg_pool_2d(x)
    jax.block_until_ready(y)
    y_ref = (
        jnp.mean(x.astype(jnp.float32).reshape(n, c, -1), axis=2)
        .astype(x.dtype)
        .reshape(n, c, 1, 1)
    )
    assert y.shape == (n, c, 1, 1), y.shape
    assert jnp.allclose(
        y.astype(jnp.float32), y_ref.astype(jnp.float32), atol=atol, rtol=rtol
    )


if __name__ == "__main__":
    key = jax.random.PRNGKey(0)

    # Required small case (matches the module's toy shape): single-tile path.
    x = jax.random.normal(key, (2, 4, 16, 16), dtype=jnp.float32)
    _check(x, atol=1e-5, rtol=1e-5)

    # Spatial-tiled accumulation path (H*W = 4096 -> 2 exact reduction tiles)
    # plus the >=2-row-block megacore split (rows = 16 -> two row tiles).
    x2 = jax.random.normal(jax.random.PRNGKey(1), (2, 8, 64, 64), dtype=jnp.float32)
    _check(x2, atol=1e-5, rtol=1e-5)

    # Ragged row-tile path (N*C = 600 -> split into two row blocks, last clipped).
    x3 = jax.random.normal(jax.random.PRNGKey(2), (3, 200, 32, 64), dtype=jnp.float32)
    _check(x3, atol=1e-5, rtol=1e-5)

    # Masked ragged spatial tile path: H*W = 45*46 = 2070 > 2048 and not
    # 128-aligned -> ts = 2048 with the last reduction tile masked in-kernel.
    x4 = jax.random.normal(jax.random.PRNGKey(3), (2, 4, 45, 46), dtype=jnp.float32)
    _check(x4, atol=1e-5, rtol=1e-5)

    # bf16 path: dtype-native sublane multiple (16) for the row tile.
    x5 = jax.random.normal(jax.random.PRNGKey(4), (2, 24, 16, 16), dtype=jnp.bfloat16)
    _check(x5, atol=1e-2, rtol=1e-2)

    print("KERNEL_OK")
</pallas_src>

<mosaic_0001>
module attributes {stable_mosaic.version = 11 : i64} {
  func.func @_gap_kernel(%arg0: i32, %arg1: i32, %arg2: memref<8x256xf32, #tpu.memory_space<vmem>>, %arg3: memref<8x1xf32, #tpu.memory_space<vmem>>, %arg4: memref<8x1xf32, #tpu.memory_space<vmem>>) attributes {dimension_semantics = [#tpu.dimension_semantics<parallel>, #tpu.dimension_semantics<arbitrary>], iteration_bounds = array<i64: 1, 1>, scalar_prefetch = 0 : i64, scratch_operands = 1 : i64, tpu.core_type = #tpu.core_type<tc>, window_params = [{transform_indices = @transform_0, window_bounds = array<i64: 8, 256>}, {transform_indices = @transform_1, window_bounds = array<i64: 8, 1>}]} {
    %c0_i32 = arith.constant 0 : i32
    %0 = arith.cmpi eq, %arg1, %c0_i32 : i32
    %1 = arith.extui %0 : i1 to i32
    %c0_i32_0 = arith.constant 0 : i32
    %2 = arith.cmpi ne, %1, %c0_i32_0 : i32
    scf.if %2 {
      %cst_8 = arith.constant 0.000000e+00 : f32
      %12 = vector.broadcast %cst_8 : f32 to vector<8x1xf32>
      %c0_9 = arith.constant 0 : index
      %c0_10 = arith.constant 0 : index
      %13 = vector.load %arg4[%c0_9, %c0_10] : memref<8x1xf32, #tpu.memory_space<vmem>>, vector<8x1xf32>
      tpu.vector_store %arg4[%c0_9, %c0_10], %12 {strides = array<i32>} : memref<8x1xf32, #tpu.memory_space<vmem>>, vector<8x1xf32>,
    } else {
    }
    %c0 = arith.constant 0 : index
    %c0_1 = arith.constant 0 : index
    %3 = vector.load %arg2[%c0, %c0_1] : memref<8x256xf32, #tpu.memory_space<vmem>>, vector<8x256xf32>
    %c0_2 = arith.constant 0 : index
    %c0_3 = arith.constant 0 : index
    %4 = vector.load %arg4[%c0_2, %c0_3] : memref<8x1xf32, #tpu.memory_space<vmem>>, vector<8x1xf32>
    %cst = arith.constant dense<0.000000e+00> : vector<8xf32>
    %5 = vector.multi_reduction <add>, %3, %cst [1] : vector<8x256xf32> to vector<8xf32>
    %6 = vector.shape_cast %5 : vector<8xf32> to vector<8x1xf32>
    %7 = arith.addf %4, %6 : vector<8x1xf32>
    %c0_4 = arith.constant 0 : index
    %c0_5 = arith.constant 0 : index
    %8 = vector.load %arg4[%c0_4, %c0_5] : memref<8x1xf32, #tpu.memory_space<vmem>>, vector<8x1xf32>
    tpu.vector_store %arg4[%c0_4, %c0_5], %7 {strides = array<i32>} : memref<8x1xf32, #tpu.memory_space<vmem>>, vector<8x1xf32>,
    %c0_i32_6 = arith.constant 0 : i32
    %9 = arith.cmpi eq, %arg1, %c0_i32_6 : i32
    %10 = arith.extui %9 : i1 to i32
    %c0_i32_7 = arith.constant 0 : i32
    %11 = arith.cmpi ne, %10, %c0_i32_7 : i32
    scf.if %11 {
      %c0_8 = arith.constant 0 : index
      %c0_9 = arith.constant 0 : index
      %12 = vector.load %arg4[%c0_8, %c0_9] : memref<8x1xf32, #tpu.memory_space<vmem>>, vector<8x1xf32>
      %cst_10 = arith.constant 3.906250e-03 : f32
      %13 = vector.broadcast %cst_10 : f32 to vector<8x1xf32>
      %14 = arith.mulf %12, %13 : vector<8x1xf32>
      %c0_11 = arith.constant 0 : index
      %c0_12 = arith.constant 0 : index
      %15 = vector.load %arg3[%c0_11, %c0_12] : memref<8x1xf32, #tpu.memory_space<vmem>>, vector<8x1xf32>
      tpu.vector_store %arg3[%c0_11, %c0_12], %14 {strides = array<i32>} : memref<8x1xf32, #tpu.memory_space<vmem>>, vector<8x1xf32>,
    } else {
    }
    return
  }
  func.func @transform_0(%arg0: i32, %arg1: i32) -> (i32, i32) {
    %c0_i32 = arith.constant 0 : i32
    return %arg0, %arg1 : i32, i32
  }
  func.func @transform_1(%arg0: i32, %arg1: i32) -> (i32, i32) {
    %c0_i32 = arith.constant 0 : i32
    %c0_i32_0 = arith.constant 0 : i32
    return %arg0, %c0_i32 : i32, i32
  }
}

</mosaic_0001>

<llo_original>
// kernel: tpu_custom_call.1
$region0: #{tpu_custom_call.1}
  #allocation0 [shape = 'u32[]', space=smem, size = 0x4, offset = 0x4, fixed_abs, tag = 'smem constant byte address 0x4 - core index']
  #allocation1 [shape = 'u32[144,128]{1,0:T(1,128)}', space=vmem, size = 0x12000, scoped, tag = 'internal scratch']
  #allocation2 [shape = 'f32[8,1]{1,0:T(8,128)}', space=vmem, size = 0x1000, scoped, tag = 'scratch operand']
  %s0 = inlined_call_operand.hbm [shape: f32[8,256], index: 0, kind: input, shape index: {}]
  %s1 = inlined_call_operand.vmem [shape: f32[8,1], index: 1, kind: output, shape index: {}]
  %s2 = sld [smem:[#allocation0]]
  $region26: #{tpu_custom_call.1} parent=0
    _
  %s4 = ssub.s32 1, %s2
  %s5 = scalar_select 0, %s4, %s2
  $region1: #{tpu_custom_call.1} parent=0
    #allocation3 [shape = 'u8[8192]{0}', space=vmem, size = 0x2000, scoped, tag = 'input window, operand 0, single buffered']
    #allocation4 [shape = 's32[1]{0}', space=sflag, size = 0x4, scoped, tag = 'scoped memory for tpu_custom_call.1']
    %6 = vsyncpa [#allocation4], 0
    // Predicated region
    $region2: #{tpu_custom_call.1} parent=1 // pred_check
      _
    $region3: #{tpu_custom_call.1} parent=1 // pred_check_branch
      %8 = sbr.rel (0) target = $region5
    $region4: #{tpu_custom_call.1} parent=1 // pred_region
      %s10 = ssub.s32 256, 256
      %11 = vsyncadd [#allocation4], %s10
      %s13 = sshll.u32 [#allocation3], 4
      %s14 = int_to_ptr.vmem [resolvable:$true] %s13
      %16 = dma.hbm_to_vmem [thread:$0]  %s0, 256, %s14, [#allocation4]
    $region5: #{tpu_custom_call.1} parent=1 // pred_fallthru
      _
    // Predicated region
    $region6: #{tpu_custom_call.1} parent=1 // pred_check
      _
    $region7: #{tpu_custom_call.1} parent=1 // pred_check_branch
      %18 = sbr.rel (0) target = $region9
    $region8: #{tpu_custom_call.1} parent=1 // pred_region
      %19 = dma.done [#allocation4], 256
    $region9: #{tpu_custom_call.1} parent=1 // pred_fallthru
      _
    %p20 = scmp.eq.s32.totalorder 0, 0
    // Predicated region
    $region10: #{tpu_custom_call.1} parent=1 // pred_check
      %p21 = pneg %p20
    $region11: #{tpu_custom_call.1} parent=1 // pred_check_branch
      %23 = sbr.rel (%p21) target = $region13
    $region12: #{tpu_custom_call.1} parent=1 // pred_region
      %vm24 = vcmask 7168
      %25 = vst.msk [vmem:[#allocation2] sm:$0xff] %vm24, 0.0
    $region13: #{tpu_custom_call.1} parent=1 // pred_fallthru
      _
    %v26 = vld [vmem:[#allocation3] sm:$0xff]
    %v27 = vld [vmem:[#allocation3 + $0x8] sm:$0xff]
    %v28 = vld [vmem:[#allocation2] sm:$0xff]
    %v29 = vadd.f32 %v26, %v27
    %30 = vadd.xlane.f32.xlu0 %v29
    %v31 = vpop.xlane.xlu0 %30
    %v32 = vadd.f32 %v28, %v31
    %vm33 = vcmask 7168
    %34 = vst.msk [vmem:[#allocation2] sm:$0xff] %vm33, %v32
    // Predicated region
    $region14: #{tpu_custom_call.1} parent=1 // pred_check
      %p35 = pneg %p20
    $region15: #{tpu_custom_call.1} parent=1 // pred_check_branch
      %37 = sbr.rel (%p35) target = $region17
    $region16: #{tpu_custom_call.1} parent=1 // pred_region
      %v38 = vld [vmem:[#allocation2] sm:$0xff]
      %v39 = vmul.f32 %v38, 0.00390625
      %40 = vst.msk [vmem:[%s1] sm:$0xff] %vm33, %v39
    $region17: #{tpu_custom_call.1} parent=1 // pred_fallthru
      _
    // Predicated region
    $region18: #{tpu_custom_call.1} parent=1 // pred_check
      _
    $region19: #{tpu_custom_call.1} parent=1 // pred_check_branch
      %42 = sbr.rel (0) target = $region21
    $region20: #{tpu_custom_call.1} parent=1 // pred_region
      _
    $region21: #{tpu_custom_call.1} parent=1 // pred_fallthru
      _
    // Predicated region
    $region22: #{tpu_custom_call.1} parent=1 // pred_check
      _
    $region23: #{tpu_custom_call.1} parent=1 // pred_check_branch
      %44 = sbr.rel (0) target = $region25
    $region24: #{tpu_custom_call.1} parent=1 // pred_region
      _
    $region25: #{tpu_custom_call.1} parent=1 // pred_fallthru
      _
    %45 = vsyncpa [#allocation4], 1

</llo_original>
